<compile_context>
chip_gen: v6e
topology: v6e:2x2x1
jax: 0.10.0
libtpu: 0.0.40
codegen_flags: <defaults>
</compile_context>

<pallas_src>
import functools

import jax
import jax.numpy as jnp
from jax.experimental import pallas as pl
from jax.experimental.pallas import tpu as pltpu


def _round_up(x: int, m: int) -> int:
    return ((x + m - 1) // m) * m


def _cdiv(a: int, b: int) -> int:
    return -(-a // b)


def _vmem_capacity_bytes() -> int:
    """Physical VMEM per core; conservative (v7x-sized) fallback."""
    try:
        info = pltpu.get_tpu_info()
        for attr in ("vmem_capacity_bytes", "vmem_size_bytes", "vmem_bytes"):
            v = getattr(info, attr, None)
            if v:
                return int(v)
    except Exception:
        pass
    return 64 * 1024 * 1024


def _mlp_glob_pool_kernel(x_ref, w_ref, b_ref, o_ref, acc_ref, *, inv_s, s_rem):
    # x_ref  : (b_blk, s_blk, D)  input tile (f32 or bf16)
    # w_ref  : (D, C)             weight, VMEM-resident across the grid
    # b_ref  : (1, C)             bias,   VMEM-resident across the grid
    # o_ref  : (b_blk, C)         output tile (written on the last S step only)
    # acc_ref: (b_blk, D) f32     sequence-sum accumulator (VMEM scratch)
    s = pl.program_id(1)
    last = pl.num_programs(1) - 1

    @pl.when(s == 0)
    def _():
        acc_ref[...] = jnp.zeros_like(acc_ref)

    # TODO(synk): on v7x with bf16 inputs the pooling could be offloaded to
    # the MXU (contract S against a ones vector) instead of VPU convert+add;
    # only worth it if a bundle dump shows the VALU slot binding.
    if s_rem == 0:
        # S divides evenly into s_blk tiles: plain accumulate on every step.
        acc_ref[...] += jnp.sum(x_ref[...].astype(jnp.float32), axis=1)
    else:
        # Ragged S tail: only the last step pays for the mask.
        @pl.when(s < last)
        def _():
            acc_ref[...] += jnp.sum(x_ref[...].astype(jnp.float32), axis=1)

        @pl.when(s == last)
        def _():
            x = x_ref[...].astype(jnp.float32)
            seq = jax.lax.broadcasted_iota(jnp.int32, x.shape, dimension=1)
            acc_ref[...] += jnp.sum(jnp.where(seq < s_rem, x, 0.0), axis=1)

    # Epilogue (once per B tile): mean scale, MXU matmul, bias add, store.
    @pl.when(s == last)
    def _():
        pooled = acc_ref[...] * inv_s                                # (b_blk, D)
        logits = jnp.dot(pooled, w_ref[...].astype(jnp.float32),
                         preferred_element_type=jnp.float32)         # (b_blk, C)
        o_ref[...] = (logits + b_ref[...].astype(jnp.float32)).astype(o_ref.dtype)


def _reference_head(x, w_t, b2d, out_dtype):
    pooled = jnp.mean(x.astype(jnp.float32), axis=1)
    return (pooled @ w_t.astype(jnp.float32) + b2d.astype(jnp.float32)).astype(out_dtype)


def mlp_glob_pool_head(x, weight, bias, *, b_blk=None, s_blk=None,
                       out_dtype=jnp.float32, use_pallas=None):
    """Mean-pool over the sequence axis, then Linear (Dropout(p=0) omitted).

    x      : (B, S, D)  float32 or bfloat16
    weight : (C, D)     PyTorch nn.Linear layout
    bias   : (C,)
    returns: (B, C)     out_dtype
    """
    B, S, D = x.shape
    C = weight.shape[0]

    # One-time parameter prep (ideally the weight is stored pre-transposed).
    w_t = jnp.asarray(weight).T                  # (D, C)
    b2d = jnp.asarray(bias).reshape(1, C)        # (1, C)

    itemsize = jnp.dtype(x.dtype).itemsize

    # Tiny-input fast path: pallas_call launch/grid overhead dwarfs the work.
    if use_pallas is None:
        use_pallas = B * S * D * itemsize >= 256 * 1024
    if not use_pallas:
        return _reference_head(x, w_t, b2d, out_dtype)

    # Packed sublane tile for the second-minor (S) axis of the x block.
    sub = {1: 32, 2: 16}.get(itemsize, 8)

    # ---- generation-aware x-block budget -----------------------------------
    vmem_cap = _vmem_capacity_bytes()
    reserve = 6 * 1024 * 1024          # W/bias/out buffers, acc scratch, internal
    x_budget = max(4 * 1024 * 1024,
                   min(int(vmem_cap * 0.45) - reserve, 48 * 1024 * 1024))

    # ---- B tile -------------------------------------------------------------
    # b_blk is 3rd-from-last on the x block (unconstrained), but second-minor
    # on the output block, so it must be a multiple of 8 or equal to B.
    if b_blk is None:
        if B <= 8:
            b_blk = B
        else:
            # >= 2 B tiles so v7x's two TensorCores both get a share.
            b_blk = min(128, _round_up((B + 1) // 2, 8))
    if b_blk >= B:
        b_blk = B
    elif b_blk % 8 != 0:
        b_blk = min(B, _round_up(b_blk, 8))
    # Shrink b_blk before letting even the minimum S block blow the budget.
    while b_blk > 8 and 2 * b_blk * sub * D * itemsize > x_budget:
        b_blk = max(8, _round_up(b_blk // 2, 8))

    # ---- S tile -------------------------------------------------------------
    if s_blk is None:
        max_s = (x_budget // (2 * b_blk * D * itemsize)) // sub * sub
        s_blk = S if (max_s <= 0 or S <= max_s) else int(max_s)
    else:
        s_blk = min(int(s_blk), S)
        if s_blk < S and s_blk % sub != 0:
            s_blk = min(S, _round_up(s_blk, sub))
    # TODO(synk): for extreme D (f32 D > ~49k) even the minimum block exceeds
    # the budget; a D-tiled accumulator would be needed there.

    s_rem = 0 if s_blk == S else S % s_blk
    grid = (_cdiv(B, b_blk), _cdiv(S, s_blk))    # reduction axis (S) last

    # ---- explicit scoped-VMEM limit matching the actual footprint ----------
    used_est = (2 * b_blk * s_blk * D * itemsize            # x double buffer
                + 2 * D * max(C, 128) * 4                   # W
                + 2 * 8 * 128 * 4                           # bias
                + 2 * max(b_blk, 8) * max(C, 128) * 4       # output
                + max(b_blk, 8) * _round_up(D, 128) * 4)    # acc scratch
    vmem_limit = int(min(vmem_cap - 2 * 1024 * 1024,
                         max(16 * 1024 * 1024,
                             _round_up(used_est + 4 * 1024 * 1024, 1 << 20))))

    kernel = functools.partial(_mlp_glob_pool_kernel,
                               inv_s=1.0 / float(S), s_rem=int(s_rem))

    return pl.pallas_call(
        kernel,
        out_shape=jax.ShapeDtypeStruct((B, C), out_dtype),
        grid=grid,
        in_specs=[
            pl.BlockSpec((b_blk, s_blk, D), lambda b, s: (b, s, 0)),
            pl.BlockSpec((D, C), lambda b, s: (0, 0)),   # constant -> resident
            pl.BlockSpec((1, C), lambda b, s: (0, 0)),   # constant -> resident
        ],
        out_specs=pl.BlockSpec((b_blk, C), lambda b, s: (b, 0)),
        scratch_shapes=[pltpu.VMEM((b_blk, D), jnp.float32)],
        compiler_params=pltpu.CompilerParams(
            dimension_semantics=("parallel", "arbitrary"),
            vmem_limit_bytes=vmem_limit),
    )(x, w_t, b2d)


if __name__ == "__main__":
    key = jax.random.PRNGKey(0)

    # --- shapes consistent with the module's forward: (batch, seq, d_model) --
    B, S, D, C = 2, 8, 32, 8
    kx, kw, kb, kx2, kw2 = jax.random.split(key, 5)

    x = jax.random.normal(kx, (B, S, D), dtype=jnp.float32)
    weight = jax.random.normal(kw, (C, D), dtype=jnp.float32) * 0.05  # (C, D)
    bias = jax.random.normal(kb, (C,), dtype=jnp.float32) * 0.05      # (C,)

    out = jax.block_until_ready(
        mlp_glob_pool_head(x, weight, bias, use_pallas=True))
    ref = jnp.mean(x, axis=1) @ weight.T + bias
    assert out.shape == (B, C)
    assert jnp.allclose(out, ref, atol=1e-5, rtol=1e-5), "mismatch (small shapes)"

    # --- exercise the multi-tile path: ragged S tail (500 = 3*128 + 116) and
    #     a partial B tile (10 = 8 + 2), with NO wrapper-side padding of x. ---
    B2, S2, D2 = 10, 500, 128
    x2 = jax.random.normal(kx2, (B2, S2, D2), dtype=jnp.float32)
    w2 = jax.random.normal(kw2, (C, D2), dtype=jnp.float32) * 0.05
    out2 = jax.block_until_ready(
        mlp_glob_pool_head(x2, w2, bias, s_blk=128, use_pallas=True))
    ref2 = jnp.mean(x2, axis=1) @ w2.T + bias
    assert out2.shape == (B2, C)
    assert jnp.allclose(out2, ref2, atol=1e-4, rtol=1e-4), "mismatch (tiled path)"

    print("KERNEL_OK")
</pallas_src>

<mosaic_0001>
module attributes {stable_mosaic.version = 11 : i64} {
  func.func @_mlp_glob_pool_kernel(%arg0: i32, %arg1: i32, %arg2: memref<2x8x32xf32, #tpu.memory_space<vmem>>, %arg3: memref<32x8xf32, #tpu.memory_space<vmem>>, %arg4: memref<1x8xf32, #tpu.memory_space<vmem>>, %arg5: memref<2x8xf32, #tpu.memory_space<vmem>>, %arg6: memref<2x32xf32, #tpu.memory_space<vmem>>) attributes {dimension_semantics = [#tpu.dimension_semantics<parallel>, #tpu.dimension_semantics<arbitrary>], iteration_bounds = array<i64: 1, 1>, scalar_prefetch = 0 : i64, scratch_operands = 1 : i64, tpu.core_type = #tpu.core_type<tc>, window_params = [{transform_indices = @transform_0, window_bounds = array<i64: 2, 8, 32>}, {pipeline_mode = #tpu.pipeline_mode<synchronous>, transform_indices = @transform_1, window_bounds = array<i64: 32, 8>}, {pipeline_mode = #tpu.pipeline_mode<synchronous>, transform_indices = @transform_2, window_bounds = array<i64: 1, 8>}, {transform_indices = @transform_3, window_bounds = array<i64: 2, 8>}]} {
    %c0_i32 = arith.constant 0 : i32
    %0 = arith.cmpi eq, %arg1, %c0_i32 : i32
    %1 = arith.extui %0 : i1 to i32
    %c0_i32_0 = arith.constant 0 : i32
    %2 = arith.cmpi ne, %1, %c0_i32_0 : i32
    scf.if %2 {
      %cst_9 = arith.constant 0.000000e+00 : f32
      %11 = vector.broadcast %cst_9 : f32 to vector<2x32xf32>
      %c0_10 = arith.constant 0 : index
      %c0_11 = arith.constant 0 : index
      %12 = vector.load %arg6[%c0_10, %c0_11] : memref<2x32xf32, #tpu.memory_space<vmem>>, vector<2x32xf32>
      tpu.vector_store %arg6[%c0_10, %c0_11], %11 {strides = array<i32>} : memref<2x32xf32, #tpu.memory_space<vmem>>, vector<2x32xf32>,
    } else {
    }
    %c0 = arith.constant 0 : index
    %c0_1 = arith.constant 0 : index
    %3 = vector.load %arg6[%c0, %c0_1] : memref<2x32xf32, #tpu.memory_space<vmem>>, vector<2x32xf32>
    %c0_2 = arith.constant 0 : index
    %c0_3 = arith.constant 0 : index
    %c0_4 = arith.constant 0 : index
    %4 = vector.load %arg2[%c0_2, %c0_3, %c0_4] : memref<2x8x32xf32, #tpu.memory_space<vmem>>, vector<2x8x32xf32>
    %cst = arith.constant dense<0.000000e+00> : vector<2x32xf32>
    %5 = vector.multi_reduction <add>, %4, %cst [1] : vector<2x8x32xf32> to vector<2x32xf32>
    %6 = arith.addf %3, %5 : vector<2x32xf32>
    %c0_5 = arith.constant 0 : index
    %c0_6 = arith.constant 0 : index
    %7 = vector.load %arg6[%c0_5, %c0_6] : memref<2x32xf32, #tpu.memory_space<vmem>>, vector<2x32xf32>
    tpu.vector_store %arg6[%c0_5, %c0_6], %6 {strides = array<i32>} : memref<2x32xf32, #tpu.memory_space<vmem>>, vector<2x32xf32>,
    %c0_i32_7 = arith.constant 0 : i32
    %8 = arith.cmpi eq, %arg1, %c0_i32_7 : i32
    %9 = arith.extui %8 : i1 to i32
    %c0_i32_8 = arith.constant 0 : i32
    %10 = arith.cmpi ne, %9, %c0_i32_8 : i32
    scf.if %10 {
      %c0_9 = arith.constant 0 : index
      %c0_10 = arith.constant 0 : index
      %11 = vector.load %arg6[%c0_9, %c0_10] : memref<2x32xf32, #tpu.memory_space<vmem>>, vector<2x32xf32>
      %cst_11 = arith.constant 1.250000e-01 : f32
      %12 = vector.broadcast %cst_11 : f32 to vector<2x32xf32>
      %13 = arith.mulf %11, %12 : vector<2x32xf32>
      %c0_12 = arith.constant 0 : index
      %c0_13 = arith.constant 0 : index
      %14 = vector.load %arg3[%c0_12, %c0_13] : memref<32x8xf32, #tpu.memory_space<vmem>>, vector<32x8xf32>
      %cst_14 = arith.constant dense<0.000000e+00> : vector<2x8xf32>
      %15 = tpu.matmul %13, %14, %cst_14 {dimension_numbers = #tpu.dot_dimension_numbers<[1], [0], [0], [1], [0, 0, 1, 1], [], []>} : vector<2x32xf32>, vector<32x8xf32>, vector<2x8xf32> -> vector<2x8xf32>
      %c0_15 = arith.constant 0 : index
      %c0_16 = arith.constant 0 : index
      %16 = vector.load %arg4[%c0_15, %c0_16] : memref<1x8xf32, #tpu.memory_space<vmem>>, vector<1x8xf32>
      %17 = vector.broadcast %16 : vector<1x8xf32> to vector<2x8xf32>
      %18 = arith.addf %15, %17 : vector<2x8xf32>
      %c0_17 = arith.constant 0 : index
      %c0_18 = arith.constant 0 : index
      %19 = vector.load %arg5[%c0_17, %c0_18] : memref<2x8xf32, #tpu.memory_space<vmem>>, vector<2x8xf32>
      tpu.vector_store %arg5[%c0_17, %c0_18], %18 {strides = array<i32>} : memref<2x8xf32, #tpu.memory_space<vmem>>, vector<2x8xf32>,
    } else {
    }
    return
  }
  func.func @transform_0(%arg0: i32, %arg1: i32) -> (i32, i32, i32) {
    %c0_i32 = arith.constant 0 : i32
    %c0_i32_0 = arith.constant 0 : i32
    return %arg0, %arg1, %c0_i32 : i32, i32, i32
  }
  func.func @transform_1(%arg0: i32, %arg1: i32) -> (i32, i32) {
    %c0_i32 = arith.constant 0 : i32
    %c0_i32_0 = arith.constant 0 : i32
    %c0_i32_1 = arith.constant 0 : i32
    return %c0_i32, %c0_i32_0 : i32, i32
  }
  func.func @transform_2(%arg0: i32, %arg1: i32) -> (i32, i32) {
    %c0_i32 = arith.constant 0 : i32
    %c0_i32_0 = arith.constant 0 : i32
    %c0_i32_1 = arith.constant 0 : i32
    return %c0_i32, %c0_i32_0 : i32, i32
  }
  func.func @transform_3(%arg0: i32, %arg1: i32) -> (i32, i32) {
    %c0_i32 = arith.constant 0 : i32
    %c0_i32_0 = arith.constant 0 : i32
    return %arg0, %c0_i32 : i32, i32
  }
}

</mosaic_0001>

<llo_original>
// kernel: tpu_custom_call.1
$region0: #{tpu_custom_call.1}
  #allocation0 [shape = 'u32[]', space=smem, size = 0x4, offset = 0x4, fixed_abs, tag = 'smem constant byte address 0x4 - core index']
  #allocation1 [shape = 'u32[144,128]{1,0:T(1,128)}', space=vmem, size = 0x12000, scoped, tag = 'internal scratch']
  #allocation2 [shape = 'f32[2,32]{1,0:T(2,128)}', space=vmem, size = 0x400, scoped, tag = 'scratch operand']
  %s0 = inlined_call_operand.vmem [shape: f32[2,8,32], index: 0, kind: input, shape index: {}]
  %s1 = inlined_call_operand.vmem [shape: f32[32,8], index: 1, kind: input, shape index: {}]
  %s2 = inlined_call_operand.vmem [shape: f32[1,8], index: 2, kind: input, shape index: {}]
  %s3 = inlined_call_operand.hbm [shape: f32[2,8], index: 3, kind: output, shape index: {}]
  %s4 = sld [smem:[#allocation0]]
  $region30: #{tpu_custom_call.1} parent=0
    _
  %s6 = ssub.s32 1, %s4
  %s7 = scalar_select 0, %s6, %s4
  $region1: #{tpu_custom_call.1} parent=0
    #allocation3 [shape = 'u8[1024]{0}', space=vmem, size = 0x400, scoped, tag = 'output window, operand 0, single buffered']
    #allocation4 [shape = 's32[1]{0}', space=sflag, size = 0x4, scoped, tag = 'scoped memory for tpu_custom_call.1']
    %8 = vsyncpa [#allocation4], 0
    // Predicated region
    $region2: #{tpu_custom_call.1} parent=1 // pred_check
      _
    $region3: #{tpu_custom_call.1} parent=1 // pred_check_branch
      %10 = sbr.rel (0) target = $region5
    $region4: #{tpu_custom_call.1} parent=1 // pred_region
      _
    $region5: #{tpu_custom_call.1} parent=1 // pred_fallthru
      _
    // Predicated region
    $region6: #{tpu_custom_call.1} parent=1 // pred_check
      _
    $region7: #{tpu_custom_call.1} parent=1 // pred_check_branch
      %12 = sbr.rel (0) target = $region9
    $region8: #{tpu_custom_call.1} parent=1 // pred_region
      _
    $region9: #{tpu_custom_call.1} parent=1 // pred_fallthru
      _
    // Predicated region
    $region10: #{tpu_custom_call.1} parent=1 // pred_check
      _
    $region11: #{tpu_custom_call.1} parent=1 // pred_check_branch
      %14 = sbr.rel (0) target = $region13
    $region12: #{tpu_custom_call.1} parent=1 // pred_region
      _
    $region13: #{tpu_custom_call.1} parent=1 // pred_fallthru
      _
    %p15 = scmp.eq.s32.totalorder 0, 0
    // Predicated region
    $region14: #{tpu_custom_call.1} parent=1 // pred_check
      %p16 = pneg %p15
    $region15: #{tpu_custom_call.1} parent=1 // pred_check_branch
      %18 = sbr.rel (%p16) target = $region17
    $region16: #{tpu_custom_call.1} parent=1 // pred_region
      %vm19 = vcmask 254976
      %20 = vst.msk [vmem:[#allocation2] sm:$0x3] %vm19, 0.0
    $region17: #{tpu_custom_call.1} parent=1 // pred_fallthru
      _
    %v21 = vld [vmem:[#allocation2] sm:$0x3]
    %v22 = vld [vmem:[%s0] sm:$0xff]
    %v23 = vld [vmem:[%s0 + $0x8] sm:$0xff]
    %vm24 = vcmask 261120
    %v25 = vsel %vm24, %v22, 0.0
    %v26 = vrot.slane %v25, 4
    %v27 = vadd.f32 %v25, %v26
    %v28 = vrot.slane %v27, 2
    %v29 = vadd.f32 %v27, %v28
    %v30 = vrot.slane %v29, 1
    %v31 = vadd.f32 %v29, %v30
    %v32 = vsel %vm24, %v23, 0.0
    %v33 = vrot.slane %v32, 4
    %v34 = vadd.f32 %v32, %v33
    %v35 = vrot.slane %v34, 2
    %v36 = vadd.f32 %v34, %v35
    %v37 = vrot.slane %v36, 1
    %v38 = vadd.f32 %v36, %v37
    %vm41 = vcmask 1041409
    %v42 = vsel %vm41, %v38, %v31
    %v44 = vadd.f32 %v21, %v42
    %vm45 = vcmask 254976
    %46 = vst.msk [vmem:[#allocation2] sm:$0x3] %vm45, %v44
    // Predicated region
    $region18: #{tpu_custom_call.1} parent=1 // pred_check
      %p47 = pneg %p15
    $region19: #{tpu_custom_call.1} parent=1 // pred_check_branch
      %49 = sbr.rel (%p47) target = $region21
    $region20: #{tpu_custom_call.1} parent=1 // pred_region
      %v50 = vld [vmem:[#allocation2] sm:$0x3]
      %v51 = vmul.f32 %v50, 0.125
      %v52 = vld [vmem:[%s1] sm:$0xff]
      %v53 = vld [vmem:[%s1 + $0x8] sm:$0xff]
      %v54 = vld [vmem:[%s1 + $0x10] sm:$0xff]
      %v55 = vld [vmem:[%s1 + $0x18] sm:$0xff]
      %v56 = vld [vmem:[%s2] sm:$0x1]
      %v58 = vlaneseq
      %v59 = vshrl.u32 %v58, 7
      %v60 = vsub.s32 0, %v59
      %v61 = vrot.slane %v56, %v60
      %v64 = vsel %vm24, %v51, 0
      %66 = vmatprep.subr.mxu0 0.0
      %67 = vmatpush1.msra.mxu0 0.0
      %68 = vmatprep.subr.mxu0 0.0
      %69 = vmatpush1.msra.mxu0 0.0
      %70 = vmatprep.subr.mxu0 0.0
      %71 = vmatpush1.msra.mxu0 0.0
      %72 = vmatprep.subr.mxu0 0.0
      %73 = vmatpush1.msra.mxu0 0.0
      %74 = vmatprep.subr.mxu0 0.0
      %75 = vmatpush1.msra.mxu0 0.0
      %76 = vmatprep.subr.mxu0 0.0
      %77 = vmatpush1.msra.mxu0 0.0
      %78 = vmatprep.subr.mxu0 0.0
      %79 = vmatpush1.msra.mxu0 0.0
      %80 = vmatprep.subr.mxu0 0.0
      %81 = vmatpush1.msra.mxu0 0.0
      %82 = vmatprep.subr.mxu0 0.0
      %83 = vmatpush1.msra.mxu0 0.0
      %84 = vmatprep.subr.mxu0 0.0
      %85 = vmatpush1.msra.mxu0 0.0
      %86 = vmatprep.subr.mxu0 0.0
      %87 = vmatpush1.msra.mxu0 0.0
      %88 = vmatprep.subr.mxu0 0.0
      %89 = vmatpush1.msra.mxu0 0.0
      %90 = vmatprep.subr.mxu0 0.0
      %91 = vmatpush1.msra.mxu0 %v55
      %92 = vmatprep.subr.mxu0 0.0
      %93 = vmatpush1.msra.mxu0 %v54
      %94 = vmatprep.subr.mxu0 0.0
      %95 = vmatpush1.msra.mxu0 %v53
      %96 = vmatprep.subr.mxu0 0.0
      %97 = vmatpush1.msra.mxu0 %v52
      %98 = vmatprep.subr.mxu0 0.0
      %99 = vmatpush2.msra.mxu0 0.0
      %100 = vmatprep.subr.mxu0 0.0
      %101 = vmatpush2.msra.mxu0 0.0
      %102 = vmatprep.subr.mxu0 0.0
      %103 = vmatpush2.msra.mxu0 0.0
      %104 = vmatprep.subr.mxu0 0.0
      %105 = vmatpush2.msra.mxu0 0.0
      %106 = vmatprep.subr.mxu0 0.0
      %107 = vmatpush2.msra.mxu0 0.0
      %108 = vmatprep.subr.mxu0 0.0
      %109 = vmatpush2.msra.mxu0 0.0
      %110 = vmatprep.subr.mxu0 0.0
      %111 = vmatpush2.msra.mxu0 0.0
      %112 = vmatprep.subr.mxu0 0.0
      %113 = vmatpush2.msra.mxu0 0.0
      %114 = vmatprep.subr.mxu0 0.0
      %115 = vmatpush2.msra.mxu0 0.0
      %116 = vmatprep.subr.mxu0 0.0
      %117 = vmatpush2.msra.mxu0 0.0
      %118 = vmatprep.subr.mxu0 0.0
      %119 = vmatpush2.msra.mxu0 0.0
      %120 = vmatprep.subr.mxu0 0.0
      %121 = vmatpush2.msra.mxu0 0.0
      %122 = vmatprep.subr.mxu0 0.0
      %123 = vmatpush2.msra.mxu0 0.0
      %124 = vmatprep.subr.mxu0 0.0
      %125 = vmatpush2.msra.mxu0 0.0
      %126 = vmatprep.subr.mxu0 0.0
      %127 = vmatpush2.msra.mxu0 0.0
      %128 = vmatprep.subr.mxu0 0.0
      %129 = vmatpush2.msra.mxu0 0.0
      %130 = vmatprep.mubr.f32.mxu0 0.0
      %131 = vmatmul.mubr.f32.gmra.mxu0 %v64
      %v132 = vpop.f32.mrf.mxu0
      %v133 = vadd.f32 %v61, %v132
      %v134 = vpop.f32.mrf.mxu0
      %135 = vdwg.mxu0
      %vm136 = vcmask 58368
      %137 = vst.msk [vmem:[#allocation3] sm:$0x3] %vm136, %v133
    $region21: #{tpu_custom_call.1} parent=1 // pred_fallthru
      _
    // Predicated region
    $region22: #{tpu_custom_call.1} parent=1 // pred_check
      _
    $region23: #{tpu_custom_call.1} parent=1 // pred_check_branch
      %139 = sbr.rel (0) target = $region25
    $region24: #{tpu_custom_call.1} parent=1 // pred_region
      %s141 = ssub.s32 32, 32
      %142 = vsyncadd [#allocation4], %s141
      %s144 = sshll.u32 [#allocation3], 4
      %s145 = int_to_ptr.vmem [resolvable:$true] %s144
      %147 = dma.vmem_to_hbm [thread:$0]  %s145, 32, %s3, [#allocation4]
    $region25: #{tpu_custom_call.1} parent=1 // pred_fallthru
      _
    // Predicated region
    $region26: #{tpu_custom_call.1} parent=1 // pred_check
      _
    $region27: #{tpu_custom_call.1} parent=1 // pred_check_branch
      %149 = sbr.rel (0) target = $region29
    $region28: #{tpu_custom_call.1} parent=1 // pred_region
      %150 = dma.done [#allocation4], 32
    $region29: #{tpu_custom_call.1} parent=1 // pred_fallthru
      _
    %151 = vsyncpa [#allocation4], 1

</llo_original>
